<compile_context>
chip_gen: v6e
topology: v6e:2x2x1
jax: 0.10.0
libtpu: 0.0.40
codegen_flags: <defaults>
</compile_context>

<pallas_src>
import math
import functools

import jax
import jax.numpy as jnp
from jax import lax
from jax.experimental import pallas as pl
from jax.experimental.pallas import tpu as pltpu


def ghost_kernel(x_ref, w1_ref, s1_ref, b1_ref, wdw_ref, mask_ref,
                 s2_ref, b2_ref, out_ref, *, width):
    """One batch element per grid step, channels-on-sublanes layout.

    x_ref    : (Cin,  HW)   input, HW = H*W flattened to lanes
    w1_ref   : (Cmid, Cin)  1x1 conv weight (PyTorch [out, in] order)
    s1/b1    : (Cmid, 1)    folded BN1 scale / shift
    wdw_ref  : (Cmid, 9)    3x3 depthwise weights, tap-major (ky*3+kx)
    mask_ref : (9,    HW)   precomputed border-validity masks per tap (0/1)
    s2/b2    : (Cmid, 1)    folded BN2 scale / shift
    out_ref  : (oup,  HW)   fused output: [:Cmid] = x1, [Cmid:oup] = x2[:oup-Cmid]
    """
    cin, hw = x_ref.shape
    cmid = w1_ref.shape[0]
    oup = out_ref.shape[0]

    x = x_ref[...]            # (Cin, HW)   single load
    w1 = w1_ref[...]          # (Cmid, Cin) single load (resident across grid)
    wdw = wdw_ref[...]        # (Cmid, 9)   single load
    masks = mask_ref[...]     # (9, HW)     single load
    s1 = s1_ref[...]
    b1 = b1_ref[...]
    s2 = s2_ref[...]
    b2 = b2_ref[...]

    # ---- primary 1x1 conv: Cin broadcast-MACs on the VPU (MXU skipped on purpose:
    #      K=Cin, N=Cmid are tiny -> a systolic matmul would be ~0% utilized). ----
    acc1 = jnp.zeros((cmid, hw), jnp.float32)
    for ci in range(cin):                                 # static, unrolled
        acc1 = acc1 + w1[:, ci:ci + 1] * x[ci:ci + 1, :]  # (Cmid,1)*(1,HW)
    x1 = acc1 * s1 + b1                                   # folded BatchNorm 1
    out_ref[0:cmid, :] = x1.astype(out_ref.dtype)         # primary branch

    # ---- depthwise 3x3, padding=1: static lane rotations (XLU) + border masks ----
    acc2 = jnp.zeros((cmid, hw), jnp.float32)
    for tap in range(9):                                  # static, unrolled
        dy, dx = tap // 3 - 1, tap % 3 - 1
        shift = (-(dy * width + dx)) % hw                 # static, non-negative
        src = pltpu.roll(x1, shift, axis=1) if shift != 0 else x1
        src = src * masks[tap:tap + 1, :]                 # zero out-of-image taps
        acc2 = acc2 + wdw[:, tap:tap + 1] * src
    x2 = acc2 * s2 + b2                                   # folded BatchNorm 2
    out_ref[cmid:oup, :] = x2[:oup - cmid, :].astype(out_ref.dtype)  # ghost branch


def _border_masks(H, W):
    """(9, H*W) float32: 1.0 where the (dy,dx)-shifted source pixel is in-image."""
    row = jnp.arange(H, dtype=jnp.int32).reshape(H, 1)
    col = jnp.arange(W, dtype=jnp.int32).reshape(1, W)
    taps = []
    for tap in range(9):
        dy, dx = tap // 3 - 1, tap % 3 - 1
        ok = ((row + dy >= 0) & (row + dy < H) &
              (col + dx >= 0) & (col + dx < W))
        taps.append(ok.reshape(1, H * W))
    return jnp.concatenate(taps, axis=0).astype(jnp.float32)


def ghost_module_forward(x_nchw, w1, s1, b1, wdw33, s2, b2, oup):
    """NCHW in / NCHW out.  Kernel layout: channels -> sublanes, H*W -> lanes."""
    N, Cin, H, W = x_nchw.shape
    Cmid = w1.shape[0]
    HW = H * W

    # Free layout change: NCHW -> (N, C, H*W). No transpose needed on either side.
    x_flat = x_nchw.reshape(N, Cin, HW).astype(jnp.float32)
    # Depthwise weights (ky, kx, c) -> (c, ky*3+kx), tap-major.
    wdw_ck = jnp.transpose(wdw33, (2, 0, 1)).reshape(Cmid, 9).astype(jnp.float32)
    tap_mask = _border_masks(H, W)                        # (9, HW)
    col = lambda v: v.reshape(-1, 1).astype(jnp.float32)  # (C,) -> (C, 1)

    kernel = functools.partial(ghost_kernel, width=W)

    bytes_accessed = 4 * (N * Cin * HW + N * oup * HW          # activations
                          + Cmid * Cin + Cmid * 9 + 9 * HW + 4 * Cmid)
    flops = 2 * N * HW * Cmid * (Cin + 9) + 6 * N * HW * Cmid  # convs + BN

    out_flat = pl.pallas_call(
        kernel,
        out_shape=jax.ShapeDtypeStruct((N, oup, HW), jnp.float32),
        grid_spec=pltpu.PrefetchScalarGridSpec(
            num_scalar_prefetch=0,
            grid=(N,),
            in_specs=[
                pl.BlockSpec((None, Cin, HW), lambda n: (n, 0, 0)),  # x
                pl.BlockSpec((Cmid, Cin), lambda n: (0, 0)),         # w1
                pl.BlockSpec((Cmid, 1), lambda n: (0, 0)),           # s1
                pl.BlockSpec((Cmid, 1), lambda n: (0, 0)),           # b1
                pl.BlockSpec((Cmid, 9), lambda n: (0, 0)),           # wdw
                pl.BlockSpec((9, HW), lambda n: (0, 0)),             # border masks
                pl.BlockSpec((Cmid, 1), lambda n: (0, 0)),           # s2
                pl.BlockSpec((Cmid, 1), lambda n: (0, 0)),           # b2
            ],
            out_specs=pl.BlockSpec((None, oup, HW), lambda n: (n, 0, 0)),
        ),
        compiler_params=pltpu.CompilerParams(
            dimension_semantics=("parallel",)),
        cost_estimate=pl.CostEstimate(
            flops=flops, transcendentals=0, bytes_accessed=bytes_accessed),
    )(x_flat, w1.astype(jnp.float32), col(s1), col(b1),
      wdw_ck, tap_mask, col(s2), col(b2))

    return out_flat.reshape(N, oup, H, W)                # NCHW, no extra HBM pass


def ghost_module_reference(x_nchw, w1, s1, b1, wdw33, s2, b2, oup):
    """Pure-JAX reference (lax conv) for validation."""
    N, Cin, H, W = x_nchw.shape
    Cmid = w1.shape[0]
    x = jnp.transpose(x_nchw, (0, 2, 3, 1)).astype(jnp.float32)     # NHWC

    x1 = lax.conv_general_dilated(
        x, jnp.transpose(w1).reshape(1, 1, Cin, Cmid), (1, 1), 'VALID',
        dimension_numbers=('NHWC', 'HWIO', 'NHWC'))
    x1 = x1 * s1.reshape(-1) + b1.reshape(-1)

    x2 = lax.conv_general_dilated(
        x1, wdw33.reshape(3, 3, 1, Cmid), (1, 1), ((1, 1), (1, 1)),
        dimension_numbers=('NHWC', 'HWIO', 'NHWC'),
        feature_group_count=Cmid)
    x2 = x2 * s2.reshape(-1) + b2.reshape(-1)

    out = jnp.concatenate([x1, x2], axis=-1)[..., :oup]
    return jnp.transpose(out, (0, 3, 1, 2))


def make_params(key, inp, oup, ratio=2, eps=1e-5):
    assert ratio == 2, "TODO(synk): kernel specialized for default ratio=2"
    Cmid = math.ceil(oup / ratio)          # init_channels
    Cnew = Cmid * (ratio - 1)              # new_channels (== Cmid for ratio=2)

    ks = jax.random.split(key, 10)
    w1 = jax.random.normal(ks[0], (Cmid, inp), jnp.float32) * 0.2   # [out, in]
    wdw = jax.random.normal(ks[1], (3, 3, Cnew), jnp.float32) * 0.2  # (ky, kx, c)

    gamma1 = jax.random.uniform(ks[2], (Cmid,), jnp.float32, 0.5, 1.5)
    beta1 = jax.random.normal(ks[3], (Cmid,), jnp.float32) * 0.1
    mean1 = jax.random.normal(ks[4], (Cmid,), jnp.float32) * 0.1
    var1 = jax.random.uniform(ks[5], (Cmid,), jnp.float32, 0.5, 1.5)
    s1 = gamma1 / jnp.sqrt(var1 + eps)
    b1 = beta1 - mean1 * s1

    gamma2 = jax.random.uniform(ks[6], (Cnew,), jnp.float32, 0.5, 1.5)
    beta2 = jax.random.normal(ks[7], (Cnew,), jnp.float32) * 0.1
    mean2 = jax.random.normal(ks[8], (Cnew,), jnp.float32) * 0.1
    var2 = jax.random.uniform(ks[9], (Cnew,), jnp.float32, 0.5, 1.5)
    s2 = gamma2 / jnp.sqrt(var2 + eps)
    b2 = beta2 - mean2 * s2

    return w1, s1, b1, wdw, s2, b2


if __name__ == "__main__":
    # GhostModule(inp=4, oup=4) -> init_channels=2, new_channels=2
    inp, oup = 4, 4
    N, H, W = 2, 16, 16

    key = jax.random.PRNGKey(0)
    kx, kp = jax.random.split(key)
    x = jax.random.normal(kx, (N, inp, H, W), jnp.float32)    # NCHW, like PyTorch

    w1, s1, b1, wdw33, s2, b2 = make_params(kp, inp, oup)

    out = ghost_module_forward(x, w1, s1, b1, wdw33, s2, b2, oup)
    out = jax.block_until_ready(out)

    ref = ghost_module_reference(x, w1, s1, b1, wdw33, s2, b2, oup)
    ref = jax.block_until_ready(ref)

    assert out.shape == (N, oup, H, W), out.shape
    if not jnp.allclose(out, ref, atol=1e-4, rtol=1e-4):
        raise AssertionError("Pallas GhostModule output does not match reference")

    print("KERNEL_OK")
</pallas_src>

<mosaic_0001>
module attributes {stable_mosaic.version = 11 : i64} {
  func.func @ghost_kernel(%arg0: i32, %arg1: memref<1x4x256xf32, #tpu.memory_space<vmem>>, %arg2: memref<2x4xf32, #tpu.memory_space<vmem>>, %arg3: memref<2x1xf32, #tpu.memory_space<vmem>>, %arg4: memref<2x1xf32, #tpu.memory_space<vmem>>, %arg5: memref<2x9xf32, #tpu.memory_space<vmem>>, %arg6: memref<9x256xf32, #tpu.memory_space<vmem>>, %arg7: memref<2x1xf32, #tpu.memory_space<vmem>>, %arg8: memref<2x1xf32, #tpu.memory_space<vmem>>, %arg9: memref<1x4x256xf32, #tpu.memory_space<vmem>>) attributes {dimension_semantics = [#tpu.dimension_semantics<parallel>], iteration_bounds = array<i64: 2>, scalar_prefetch = 0 : i64, scratch_operands = 0 : i64, tpu.core_type = #tpu.core_type<tc>, window_params = [{transform_indices = @transform_0, window_bounds = array<i64: 1, 4, 256>}, {pipeline_mode = #tpu.pipeline_mode<synchronous>, transform_indices = @transform_1, window_bounds = array<i64: 2, 4>}, {pipeline_mode = #tpu.pipeline_mode<synchronous>, transform_indices = @transform_2, window_bounds = array<i64: 2, 1>}, {pipeline_mode = #tpu.pipeline_mode<synchronous>, transform_indices = @transform_3, window_bounds = array<i64: 2, 1>}, {pipeline_mode = #tpu.pipeline_mode<synchronous>, transform_indices = @transform_4, window_bounds = array<i64: 2, 9>}, {pipeline_mode = #tpu.pipeline_mode<synchronous>, transform_indices = @transform_5, window_bounds = array<i64: 9, 256>}, {pipeline_mode = #tpu.pipeline_mode<synchronous>, transform_indices = @transform_6, window_bounds = array<i64: 2, 1>}, {pipeline_mode = #tpu.pipeline_mode<synchronous>, transform_indices = @transform_7, window_bounds = array<i64: 2, 1>}, {transform_indices = @transform_8, window_bounds = array<i64: 1, 4, 256>}]} {
    %c0 = arith.constant 0 : index
    %c0_0 = arith.constant 0 : index
    %c0_1 = arith.constant 0 : index
    %0 = vector.load %arg1[%c0, %c0_0, %c0_1] : memref<1x4x256xf32, #tpu.memory_space<vmem>>, vector<1x4x256xf32>
    %1 = vector.shape_cast %0 : vector<1x4x256xf32> to vector<4x256xf32>
    %c0_2 = arith.constant 0 : index
    %c0_3 = arith.constant 0 : index
    %2 = vector.load %arg2[%c0_2, %c0_3] : memref<2x4xf32, #tpu.memory_space<vmem>>, vector<2x4xf32>
    %c0_4 = arith.constant 0 : index
    %c0_5 = arith.constant 0 : index
    %3 = vector.load %arg5[%c0_4, %c0_5] : memref<2x9xf32, #tpu.memory_space<vmem>>, vector<2x9xf32>
    %c0_6 = arith.constant 0 : index
    %c0_7 = arith.constant 0 : index
    %4 = vector.load %arg6[%c0_6, %c0_7] : memref<9x256xf32, #tpu.memory_space<vmem>>, vector<9x256xf32>
    %c0_8 = arith.constant 0 : index
    %c0_9 = arith.constant 0 : index
    %5 = vector.load %arg3[%c0_8, %c0_9] : memref<2x1xf32, #tpu.memory_space<vmem>>, vector<2x1xf32>
    %c0_10 = arith.constant 0 : index
    %c0_11 = arith.constant 0 : index
    %6 = vector.load %arg4[%c0_10, %c0_11] : memref<2x1xf32, #tpu.memory_space<vmem>>, vector<2x1xf32>
    %c0_12 = arith.constant 0 : index
    %c0_13 = arith.constant 0 : index
    %7 = vector.load %arg7[%c0_12, %c0_13] : memref<2x1xf32, #tpu.memory_space<vmem>>, vector<2x1xf32>
    %c0_14 = arith.constant 0 : index
    %c0_15 = arith.constant 0 : index
    %8 = vector.load %arg8[%c0_14, %c0_15] : memref<2x1xf32, #tpu.memory_space<vmem>>, vector<2x1xf32>
    %cst = arith.constant 0.000000e+00 : f32
    %9 = vector.broadcast %cst : f32 to vector<2x256xf32>
    %10 = vector.extract_strided_slice %2 {offsets = [0, 0], sizes = [2, 1], strides = [1, 1]} : vector<2x4xf32> to vector<2x1xf32>
    %11 = vector.extract_strided_slice %1 {offsets = [0, 0], sizes = [1, 256], strides = [1, 1]} : vector<4x256xf32> to vector<1x256xf32>
    %12 = vector.broadcast %10 : vector<2x1xf32> to vector<2x256xf32>
    %13 = vector.broadcast %11 : vector<1x256xf32> to vector<2x256xf32>
    %14 = arith.mulf %12, %13 : vector<2x256xf32>
    %15 = arith.addf %9, %14 : vector<2x256xf32>
    %16 = vector.extract_strided_slice %2 {offsets = [0, 1], sizes = [2, 1], strides = [1, 1]} : vector<2x4xf32> to vector<2x1xf32>
    %17 = vector.extract_strided_slice %1 {offsets = [1, 0], sizes = [1, 256], strides = [1, 1]} : vector<4x256xf32> to vector<1x256xf32>
    %18 = vector.broadcast %16 : vector<2x1xf32> to vector<2x256xf32>
    %19 = vector.broadcast %17 : vector<1x256xf32> to vector<2x256xf32>
    %20 = arith.mulf %18, %19 : vector<2x256xf32>
    %21 = arith.addf %15, %20 : vector<2x256xf32>
    %22 = vector.extract_strided_slice %2 {offsets = [0, 2], sizes = [2, 1], strides = [1, 1]} : vector<2x4xf32> to vector<2x1xf32>
    %23 = vector.extract_strided_slice %1 {offsets = [2, 0], sizes = [1, 256], strides = [1, 1]} : vector<4x256xf32> to vector<1x256xf32>
    %24 = vector.broadcast %22 : vector<2x1xf32> to vector<2x256xf32>
    %25 = vector.broadcast %23 : vector<1x256xf32> to vector<2x256xf32>
    %26 = arith.mulf %24, %25 : vector<2x256xf32>
    %27 = arith.addf %21, %26 : vector<2x256xf32>
    %28 = vector.extract_strided_slice %2 {offsets = [0, 3], sizes = [2, 1], strides = [1, 1]} : vector<2x4xf32> to vector<2x1xf32>
    %29 = vector.extract_strided_slice %1 {offsets = [3, 0], sizes = [1, 256], strides = [1, 1]} : vector<4x256xf32> to vector<1x256xf32>
    %30 = vector.broadcast %28 : vector<2x1xf32> to vector<2x256xf32>
    %31 = vector.broadcast %29 : vector<1x256xf32> to vector<2x256xf32>
    %32 = arith.mulf %30, %31 : vector<2x256xf32>
    %33 = arith.addf %27, %32 : vector<2x256xf32>
    %34 = vector.broadcast %5 : vector<2x1xf32> to vector<2x256xf32>
    %35 = arith.mulf %33, %34 : vector<2x256xf32>
    %36 = vector.broadcast %6 : vector<2x1xf32> to vector<2x256xf32>
    %37 = arith.addf %35, %36 : vector<2x256xf32>
    %c0_16 = arith.constant 0 : index
    %c0_17 = arith.constant 0 : index
    %c0_18 = arith.constant 0 : index
    %38 = vector.load %arg9[%c0_16, %c0_17, %c0_18] : memref<1x4x256xf32, #tpu.memory_space<vmem>>, vector<1x2x256xf32>
    %39 = vector.shape_cast %38 : vector<1x2x256xf32> to vector<2x256xf32>
    %40 = vector.shape_cast %37 : vector<2x256xf32> to vector<1x2x256xf32>
    tpu.vector_store %arg9[%c0_16, %c0_17, %c0_18], %40 {strides = array<i32>} : memref<1x4x256xf32, #tpu.memory_space<vmem>>, vector<1x2x256xf32>,
    %cst_19 = arith.constant 0.000000e+00 : f32
    %41 = vector.broadcast %cst_19 : f32 to vector<2x256xf32>
    %c17_i32 = arith.constant 17 : i32
    %42 = tpu.dynamic_rotate %37 by %c17_i32 dim 1 : vector<2x256xf32>, i32 -> vector<2x256xf32>
    %43 = vector.extract_strided_slice %4 {offsets = [0, 0], sizes = [1, 256], strides = [1, 1]} : vector<9x256xf32> to vector<1x256xf32>
    %44 = vector.broadcast %43 : vector<1x256xf32> to vector<2x256xf32>
    %45 = arith.mulf %42, %44 : vector<2x256xf32>
    %46 = vector.extract_strided_slice %3 {offsets = [0, 0], sizes = [2, 1], strides = [1, 1]} : vector<2x9xf32> to vector<2x1xf32>
    %47 = vector.broadcast %46 : vector<2x1xf32> to vector<2x256xf32>
    %48 = arith.mulf %47, %45 : vector<2x256xf32>
    %49 = arith.addf %41, %48 : vector<2x256xf32>
    %c16_i32 = arith.constant 16 : i32
    %50 = tpu.dynamic_rotate %37 by %c16_i32 dim 1 : vector<2x256xf32>, i32 -> vector<2x256xf32>
    %51 = vector.extract_strided_slice %4 {offsets = [1, 0], sizes = [1, 256], strides = [1, 1]} : vector<9x256xf32> to vector<1x256xf32>
    %52 = vector.broadcast %51 : vector<1x256xf32> to vector<2x256xf32>
    %53 = arith.mulf %50, %52 : vector<2x256xf32>
    %54 = vector.extract_strided_slice %3 {offsets = [0, 1], sizes = [2, 1], strides = [1, 1]} : vector<2x9xf32> to vector<2x1xf32>
    %55 = vector.broadcast %54 : vector<2x1xf32> to vector<2x256xf32>
    %56 = arith.mulf %55, %53 : vector<2x256xf32>
    %57 = arith.addf %49, %56 : vector<2x256xf32>
    %c15_i32 = arith.constant 15 : i32
    %58 = tpu.dynamic_rotate %37 by %c15_i32 dim 1 : vector<2x256xf32>, i32 -> vector<2x256xf32>
    %59 = vector.extract_strided_slice %4 {offsets = [2, 0], sizes = [1, 256], strides = [1, 1]} : vector<9x256xf32> to vector<1x256xf32>
    %60 = vector.broadcast %59 : vector<1x256xf32> to vector<2x256xf32>
    %61 = arith.mulf %58, %60 : vector<2x256xf32>
    %62 = vector.extract_strided_slice %3 {offsets = [0, 2], sizes = [2, 1], strides = [1, 1]} : vector<2x9xf32> to vector<2x1xf32>
    %63 = vector.broadcast %62 : vector<2x1xf32> to vector<2x256xf32>
    %64 = arith.mulf %63, %61 : vector<2x256xf32>
    %65 = arith.addf %57, %64 : vector<2x256xf32>
    %c1_i32 = arith.constant 1 : i32
    %66 = tpu.dynamic_rotate %37 by %c1_i32 dim 1 : vector<2x256xf32>, i32 -> vector<2x256xf32>
    %67 = vector.extract_strided_slice %4 {offsets = [3, 0], sizes = [1, 256], strides = [1, 1]} : vector<9x256xf32> to vector<1x256xf32>
    %68 = vector.broadcast %67 : vector<1x256xf32> to vector<2x256xf32>
    %69 = arith.mulf %66, %68 : vector<2x256xf32>
    %70 = vector.extract_strided_slice %3 {offsets = [0, 3], sizes = [2, 1], strides = [1, 1]} : vector<2x9xf32> to vector<2x1xf32>
    %71 = vector.broadcast %70 : vector<2x1xf32> to vector<2x256xf32>
    %72 = arith.mulf %71, %69 : vector<2x256xf32>
    %73 = arith.addf %65, %72 : vector<2x256xf32>
    %74 = vector.extract_strided_slice %4 {offsets = [4, 0], sizes = [1, 256], strides = [1, 1]} : vector<9x256xf32> to vector<1x256xf32>
    %75 = vector.broadcast %74 : vector<1x256xf32> to vector<2x256xf32>
    %76 = arith.mulf %37, %75 : vector<2x256xf32>
    %77 = vector.extract_strided_slice %3 {offsets = [0, 4], sizes = [2, 1], strides = [1, 1]} : vector<2x9xf32> to vector<2x1xf32>
    %78 = vector.broadcast %77 : vector<2x1xf32> to vector<2x256xf32>
    %79 = arith.mulf %78, %76 : vector<2x256xf32>
    %80 = arith.addf %73, %79 : vector<2x256xf32>
    %c255_i32 = arith.constant 255 : i32
    %81 = tpu.dynamic_rotate %37 by %c255_i32 dim 1 : vector<2x256xf32>, i32 -> vector<2x256xf32>
    %82 = vector.extract_strided_slice %4 {offsets = [5, 0], sizes = [1, 256], strides = [1, 1]} : vector<9x256xf32> to vector<1x256xf32>
    %83 = vector.broadcast %82 : vector<1x256xf32> to vector<2x256xf32>
    %84 = arith.mulf %81, %83 : vector<2x256xf32>
    %85 = vector.extract_strided_slice %3 {offsets = [0, 5], sizes = [2, 1], strides = [1, 1]} : vector<2x9xf32> to vector<2x1xf32>
    %86 = vector.broadcast %85 : vector<2x1xf32> to vector<2x256xf32>
    %87 = arith.mulf %86, %84 : vector<2x256xf32>
    %88 = arith.addf %80, %87 : vector<2x256xf32>
    %c241_i32 = arith.constant 241 : i32
    %89 = tpu.dynamic_rotate %37 by %c241_i32 dim 1 : vector<2x256xf32>, i32 -> vector<2x256xf32>
    %90 = vector.extract_strided_slice %4 {offsets = [6, 0], sizes = [1, 256], strides = [1, 1]} : vector<9x256xf32> to vector<1x256xf32>
    %91 = vector.broadcast %90 : vector<1x256xf32> to vector<2x256xf32>
    %92 = arith.mulf %89, %91 : vector<2x256xf32>
    %93 = vector.extract_strided_slice %3 {offsets = [0, 6], sizes = [2, 1], strides = [1, 1]} : vector<2x9xf32> to vector<2x1xf32>
    %94 = vector.broadcast %93 : vector<2x1xf32> to vector<2x256xf32>
    %95 = arith.mulf %94, %92 : vector<2x256xf32>
    %96 = arith.addf %88, %95 : vector<2x256xf32>
    %c240_i32 = arith.constant 240 : i32
    %97 = tpu.dynamic_rotate %37 by %c240_i32 dim 1 : vector<2x256xf32>, i32 -> vector<2x256xf32>
    %98 = vector.extract_strided_slice %4 {offsets = [7, 0], sizes = [1, 256], strides = [1, 1]} : vector<9x256xf32> to vector<1x256xf32>
    %99 = vector.broadcast %98 : vector<1x256xf32> to vector<2x256xf32>
    %100 = arith.mulf %97, %99 : vector<2x256xf32>
    %101 = vector.extract_strided_slice %3 {offsets = [0, 7], sizes = [2, 1], strides = [1, 1]} : vector<2x9xf32> to vector<2x1xf32>
    %102 = vector.broadcast %101 : vector<2x1xf32> to vector<2x256xf32>
    %103 = arith.mulf %102, %100 : vector<2x256xf32>
    %104 = arith.addf %96, %103 : vector<2x256xf32>
    %c239_i32 = arith.constant 239 : i32
    %105 = tpu.dynamic_rotate %37 by %c239_i32 dim 1 : vector<2x256xf32>, i32 -> vector<2x256xf32>
    %106 = vector.extract_strided_slice %4 {offsets = [8, 0], sizes = [1, 256], strides = [1, 1]} : vector<9x256xf32> to vector<1x256xf32>
    %107 = vector.broadcast %106 : vector<1x256xf32> to vector<2x256xf32>
    %108 = arith.mulf %105, %107 : vector<2x256xf32>
    %109 = vector.extract_strided_slice %3 {offsets = [0, 8], sizes = [2, 1], strides = [1, 1]} : vector<2x9xf32> to vector<2x1xf32>
    %110 = vector.broadcast %109 : vector<2x1xf32> to vector<2x256xf32>
    %111 = arith.mulf %110, %108 : vector<2x256xf32>
    %112 = arith.addf %104, %111 : vector<2x256xf32>
    %113 = vector.broadcast %7 : vector<2x1xf32> to vector<2x256xf32>
    %114 = arith.mulf %112, %113 : vector<2x256xf32>
    %115 = vector.broadcast %8 : vector<2x1xf32> to vector<2x256xf32>
    %116 = arith.addf %114, %115 : vector<2x256xf32>
    %c0_20 = arith.constant 0 : index
    %c2 = arith.constant 2 : index
    %c0_21 = arith.constant 0 : index
    %117 = vector.load %arg9[%c0_20, %c2, %c0_21] : memref<1x4x256xf32, #tpu.memory_space<vmem>>, vector<1x2x256xf32>
    %118 = vector.shape_cast %117 : vector<1x2x256xf32> to vector<2x256xf32>
    %119 = vector.shape_cast %116 : vector<2x256xf32> to vector<1x2x256xf32>
    tpu.vector_store %arg9[%c0_20, %c2, %c0_21], %119 {strides = array<i32>} : memref<1x4x256xf32, #tpu.memory_space<vmem>>, vector<1x2x256xf32>,
    return
  }
  func.func @transform_0(%arg0: i32) -> (i32, i32, i32) {
    %c0_i32 = arith.constant 0 : i32
    %c0_i32_0 = arith.constant 0 : i32
    %c0_i32_1 = arith.constant 0 : i32
    return %arg0, %c0_i32, %c0_i32_0 : i32, i32, i32
  }
  func.func @transform_1(%arg0: i32) -> (i32, i32) {
    %c0_i32 = arith.constant 0 : i32
    %c0_i32_0 = arith.constant 0 : i32
    %c0_i32_1 = arith.constant 0 : i32
    return %c0_i32, %c0_i32_0 : i32, i32
  }
  func.func @transform_2(%arg0: i32) -> (i32, i32) {
    %c0_i32 = arith.constant 0 : i32
    %c0_i32_0 = arith.constant 0 : i32
    %c0_i32_1 = arith.constant 0 : i32
    return %c0_i32, %c0_i32_0 : i32, i32
  }
  func.func @transform_3(%arg0: i32) -> (i32, i32) {
    %c0_i32 = arith.constant 0 : i32
    %c0_i32_0 = arith.constant 0 : i32
    %c0_i32_1 = arith.constant 0 : i32
    return %c0_i32, %c0_i32_0 : i32, i32
  }
  func.func @transform_4(%arg0: i32) -> (i32, i32) {
    %c0_i32 = arith.constant 0 : i32
    %c0_i32_0 = arith.constant 0 : i32
    %c0_i32_1 = arith.constant 0 : i32
    return %c0_i32, %c0_i32_0 : i32, i32
  }
  func.func @transform_5(%arg0: i32) -> (i32, i32) {
    %c0_i32 = arith.constant 0 : i32
    %c0_i32_0 = arith.constant 0 : i32
    %c0_i32_1 = arith.constant 0 : i32
    return %c0_i32, %c0_i32_0 : i32, i32
  }
  func.func @transform_6(%arg0: i32) -> (i32, i32) {
    %c0_i32 = arith.constant 0 : i32
    %c0_i32_0 = arith.constant 0 : i32
    %c0_i32_1 = arith.constant 0 : i32
    return %c0_i32, %c0_i32_0 : i32, i32
  }
  func.func @transform_7(%arg0: i32) -> (i32, i32) {
    %c0_i32 = arith.constant 0 : i32
    %c0_i32_0 = arith.constant 0 : i32
    %c0_i32_1 = arith.constant 0 : i32
    return %c0_i32, %c0_i32_0 : i32, i32
  }
  func.func @transform_8(%arg0: i32) -> (i32, i32, i32) {
    %c0_i32 = arith.constant 0 : i32
    %c0_i32_0 = arith.constant 0 : i32
    %c0_i32_1 = arith.constant 0 : i32
    return %arg0, %c0_i32, %c0_i32_0 : i32, i32, i32
  }
}

</mosaic_0001>

<llo_original>
// kernel: tpu_custom_call.1
$region0: #{tpu_custom_call.1}
  #allocation0 [shape = 'u32[]', space=smem, size = 0x4, offset = 0x4, fixed_abs, tag = 'smem constant byte address 0x4 - core index']
  #allocation1 [shape = 'u32[144,128]{1,0:T(1,128)}', space=vmem, size = 0x12000, scoped, tag = 'internal scratch']
  %s0 = inlined_call_operand.hbm [shape: f32[2,4,256], index: 0, kind: input, shape index: {}]
  %s1 = inlined_call_operand.vmem [shape: f32[2,4], index: 1, kind: input, shape index: {}]
  %s2 = inlined_call_operand.vmem [shape: f32[2,1], index: 2, kind: input, shape index: {}]
  %s3 = inlined_call_operand.vmem [shape: f32[2,1], index: 3, kind: input, shape index: {}]
  %s4 = inlined_call_operand.vmem [shape: f32[2,9], index: 4, kind: input, shape index: {}]
  %s5 = inlined_call_operand.hbm [shape: f32[9,256], index: 5, kind: input, shape index: {}]
  %s6 = inlined_call_operand.vmem [shape: f32[2,1], index: 6, kind: input, shape index: {}]
  %s7 = inlined_call_operand.vmem [shape: f32[2,1], index: 7, kind: input, shape index: {}]
  %s8 = inlined_call_operand.hbm [shape: f32[2,4,256], index: 8, kind: output, shape index: {}]
  %s9 = sld [smem:[#allocation0]]
  $region73: #{tpu_custom_call.1} parent=0
    _
  %s11 = ssub.s32 1, %s9
  %s12 = scalar_select 0, %s11, %s9
  $region1: #{tpu_custom_call.1} parent=0
    #allocation2 [shape = 'u8[8192]{0}', space=vmem, size = 0x2000, scoped, tag = 'input window, operand 0']
    #allocation3 [shape = 's32[2]{0}', space=sflag, size = 0x8, scoped, tag = 'scoped memory for tpu_custom_call.1']
    #allocation4 [shape = 's32[2]{0}', space=sflag, size = 0x8, scoped, tag = 'scoped memory for tpu_custom_call.1']
    #allocation5 [shape = 'u8[16384]{0}', space=vmem, size = 0x4000, scoped, tag = 'input window, operand 5, single buffered']
    #allocation6 [shape = 's32[1]{0}', space=sflag, size = 0x4, scoped, tag = 'scoped memory for tpu_custom_call.1']
    #allocation7 [shape = 'u8[8192]{0}', space=vmem, size = 0x2000, scoped, tag = 'output window, operand 0']
    %13 = vsyncpa [#allocation3], 0
    %s14 = scalar_lea.sflag [#allocation3], 1
    %15 = vsyncpa %s14, 0
    %16 = vsyncpa [#allocation6], 0
    %17 = vsyncpa [#allocation4], 0
    %s18 = scalar_lea.sflag [#allocation4], 1
    %19 = vsyncpa %s18, 0
    loop: start=0, step=1, limit=4
    $region2: #{tpu_custom_call.1} parent=1 // loop_pre_header
      _
    $region3: #{tpu_custom_call.1} parent=1 // loop_header
      %s21 = sphi 0, %s25
      %p22 = scmp.ge.s32.totalorder %s21, 4
      %s31 = sphi 0, %s33
      %s34 = sphi 0, %s31
      %s35 = sphi 0, %s34
      %s51 = sphi 0, %s35
      %s55 = sphi 0, %s55
      %s57 = sphi 0, %s55
      %s58 = sphi 0, %s57
      %s72 = sphi 0, %s58
      %s76 = sphi 0, %s76
      %s78 = sphi 0, %s76
      %s79 = sphi 0, %s78
      %s93 = sphi 0, %s79
      %s97 = sphi 0, %s97
      %s99 = sphi 0, %s97
      %s100 = sphi 0, %s99
      %s114 = sphi 0, %s100
      %s118 = sphi 0, %s118
      %s120 = sphi 0, %s118
      %s121 = sphi 0, %s120
      %s135 = sphi 0, %s121
      %s139 = sphi 0, %s139
      %s141 = sphi 0, %s139
      %s142 = sphi 0, %s141
      %s156 = sphi 0, %s142
      %s160 = sphi 0, %s160
      %s162 = sphi 0, %s160
      %s163 = sphi 0, %s162
      %s177 = sphi 0, %s163
      %s181 = sphi 0, %s181
      %s183 = sphi 0, %s181
      %s184 = sphi 0, %s183
      %s198 = sphi 0, %s184
      %s204 = sphi 0, %s206
      %s207 = sphi 0, %s204
      %s208 = sphi 0, %s207
      %s224 = sphi 0, %s208
    $region4: #{tpu_custom_call.1} parent=1 // loop_header_branch
      %24 = sbr.rel (%p22) target = $region8
    $region5: #{tpu_custom_call.1} parent=1 // loop_body
      %s26 = ssub.s32 %s21, 1
      %s27 = ssub.s32 %s21, 2
      %s28 = sadd.s32 %s21, 1
      %s29 = ssub.s32 %s21, %s28
      %p30 = scmp.eq.s32.totalorder %s29, 0
      %s32 = sadd.s32 %s31, 1
      %s33 = scalar_select %p30, %s31, %s32
      %p36 = pneg %p30
      %p37 = scmp.eq.s32.totalorder %s21, 1
      %p38 = por %p36, %p37
      %p39 = scmp.ne.s32.totalorder %s31, %s34
      %p40 = scmp.eq.s32.totalorder %s21, 0
      %p41 = por %p39, %p40
      %p42 = scmp.ne.s32.totalorder %s31, %s34
      %p43 = scmp.eq.s32.totalorder %s26, 1
      %p44 = por %p42, %p43
      %p45 = scmp.ne.s32.totalorder %s34, %s35
      %p46 = scmp.eq.s32.totalorder %s26, 0
      %p47 = por %p45, %p46
      %p48 = scmp.ne.s32.totalorder %s34, %s35
      %p49 = scmp.eq.s32.totalorder %s27, 1
      %p50 = por %p48, %p49
      %p52 = scmp.ne.s32.totalorder %s35, %s51
      %p53 = scmp.eq.s32.totalorder %s27, 0
      %p54 = por %p52, %p53
      %s56 = sadd.s32 %s55, 1
      %p59 = scmp.eq.s32.totalorder %s21, 1
      %p60 = scmp.ne.s32.totalorder %s55, %s57
      %p61 = scmp.eq.s32.totalorder %s21, 0
      %p62 = por %p60, %p61
      %p63 = scmp.ne.s32.totalorder %s55, %s57
      %p64 = scmp.eq.s32.totalorder %s26, 1
      %p65 = por %p63, %p64
      %p66 = scmp.ne.s32.totalorder %s57, %s58
      %p67 = scmp.eq.s32.totalorder %s26, 0
      %p68 = por %p66, %p67
      %p69 = scmp.ne.s32.totalorder %s57, %s58
      %p70 = scmp.eq.s32.totalorder %s27, 1
      %p71 = por %p69, %p70
      %p73 = scmp.ne.s32.totalorder %s58, %s72
      %p74 = scmp.eq.s32.totalorder %s27, 0
      %p75 = por %p73, %p74
      %s77 = sadd.s32 %s76, 1
      %p80 = scmp.eq.s32.totalorder %s21, 1
      %p81 = scmp.ne.s32.totalorder %s76, %s78
      %p82 = scmp.eq.s32.totalorder %s21, 0
      %p83 = por %p81, %p82
      %p84 = scmp.ne.s32.totalorder %s76, %s78
      %p85 = scmp.eq.s32.totalorder %s26, 1
      %p86 = por %p84, %p85
      %p87 = scmp.ne.s32.totalorder %s78, %s79
      %p88 = scmp.eq.s32.totalorder %s26, 0
      %p89 = por %p87, %p88
      %p90 = scmp.ne.s32.totalorder %s78, %s79
      %p91 = scmp.eq.s32.totalorder %s27, 1
      %p92 = por %p90, %p91
      %p94 = scmp.ne.s32.totalorder %s79, %s93
      %p95 = scmp.eq.s32.totalorder %s27, 0
      %p96 = por %p94, %p95
      %s98 = sadd.s32 %s97, 1
      %p101 = scmp.eq.s32.totalorder %s21, 1
      %p102 = scmp.ne.s32.totalorder %s97, %s99
      %p103 = scmp.eq.s32.totalorder %s21, 0
      %p104 = por %p102, %p103
      %p105 = scmp.ne.s32.totalorder %s97, %s99
      %p106 = scmp.eq.s32.totalorder %s26, 1
      %p107 = por %p105, %p106
      %p108 = scmp.ne.s32.totalorder %s99, %s100
      %p109 = scmp.eq.s32.totalorder %s26, 0
      %p110 = por %p108, %p109
      %p111 = scmp.ne.s32.totalorder %s99, %s100
      %p112 = scmp.eq.s32.totalorder %s27, 1
      %p113 = por %p111, %p112
      %p115 = scmp.ne.s32.totalorder %s100, %s114
      %p116 = scmp.eq.s32.totalorder %s27, 0
      %p117 = por %p115, %p116
      %s119 = sadd.s32 %s118, 1
      %p122 = scmp.eq.s32.totalorder %s21, 1
      %p123 = scmp.ne.s32.totalorder %s118, %s120
      %p124 = scmp.eq.s32.totalorder %s21, 0
      %p125 = por %p123, %p124
      %p126 = scmp.ne.s32.totalorder %s118, %s120
      %p127 = scmp.eq.s32.totalorder %s26, 1
      %p128 = por %p126, %p127
      %p129 = scmp.ne.s32.totalorder %s120, %s121
      %p130 = scmp.eq.s32.totalorder %s26, 0
      %p131 = por %p129, %p130
      %p132 = scmp.ne.s32.totalorder %s120, %s121
      %p133 = scmp.eq.s32.totalorder %s27, 1
      %p134 = por %p132, %p133
      %p136 = scmp.ne.s32.totalorder %s121, %s135
      %p137 = scmp.eq.s32.totalorder %s27, 0
      %p138 = por %p136, %p137
      %s140 = sadd.s32 %s139, 1
      %p143 = scmp.eq.s32.totalorder %s21, 1
      %p144 = scmp.ne.s32.totalorder %s139, %s141
      %p145 = scmp.eq.s32.totalorder %s21, 0
      %p146 = por %p144, %p145
      %p147 = scmp.ne.s32.totalorder %s139, %s141
      %p148 = scmp.eq.s32.totalorder %s26, 1
      %p149 = por %p147, %p148
      %p150 = scmp.ne.s32.totalorder %s141, %s142
      %p151 = scmp.eq.s32.totalorder %s26, 0
      %p152 = por %p150, %p151
      %p153 = scmp.ne.s32.totalorder %s141, %s142
      %p154 = scmp.eq.s32.totalorder %s27, 1
      %p155 = por %p153, %p154
      %p157 = scmp.ne.s32.totalorder %s142, %s156
      %p158 = scmp.eq.s32.totalorder %s27, 0
      %p159 = por %p157, %p158
      %s161 = sadd.s32 %s160, 1
      %p164 = scmp.eq.s32.totalorder %s21, 1
      %p165 = scmp.ne.s32.totalorder %s160, %s162
      %p166 = scmp.eq.s32.totalorder %s21, 0
      %p167 = por %p165, %p166
      %p168 = scmp.ne.s32.totalorder %s160, %s162
      %p169 = scmp.eq.s32.totalorder %s26, 1
      %p170 = por %p168, %p169
      %p171 = scmp.ne.s32.totalorder %s162, %s163
      %p172 = scmp.eq.s32.totalorder %s26, 0
      %p173 = por %p171, %p172
      %p174 = scmp.ne.s32.totalorder %s162, %s163
      %p175 = scmp.eq.s32.totalorder %s27, 1
      %p176 = por %p174, %p175
      %p178 = scmp.ne.s32.totalorder %s163, %s177
      %p179 = scmp.eq.s32.totalorder %s27, 0
      %p180 = por %p178, %p179
      %s182 = sadd.s32 %s181, 1
      %p185 = scmp.eq.s32.totalorder %s21, 1
      %p186 = scmp.ne.s32.totalorder %s181, %s183
      %p187 = scmp.eq.s32.totalorder %s21, 0
      %p188 = por %p186, %p187
      %p189 = scmp.ne.s32.totalorder %s181, %s183
      %p190 = scmp.eq.s32.totalorder %s26, 1
      %p191 = por %p189, %p190
      %p192 = scmp.ne.s32.totalorder %s183, %s184
      %p193 = scmp.eq.s32.totalorder %s26, 0
      %p194 = por %p192, %p193
      %p195 = scmp.ne.s32.totalorder %s183, %s184
      %p196 = scmp.eq.s32.totalorder %s27, 1
      %p197 = por %p195, %p196
      %p199 = scmp.ne.s32.totalorder %s184, %s198
      %p200 = scmp.eq.s32.totalorder %s27, 0
      %p201 = por %p199, %p200
      %s202 = ssub.s32 %s21, %s28
      %p203 = scmp.eq.s32.totalorder %s202, 0
      %s205 = sadd.s32 %s204, 1
      %s206 = scalar_select %p203, %s204, %s205
      %p209 = pneg %p203
      %p210 = scmp.eq.s32.totalorder %s21, 1
      %p211 = por %p209, %p210
      %p212 = scmp.ne.s32.totalorder %s204, %s207
      %p213 = scmp.eq.s32.totalorder %s21, 0
      %p214 = por %p212, %p213
      %p215 = scmp.ne.s32.totalorder %s204, %s207
      %p216 = scmp.eq.s32.totalorder %s26, 1
      %p217 = por %p215, %p216
      %p218 = scmp.ne.s32.totalorder %s207, %s208
      %p219 = scmp.eq.s32.totalorder %s26, 0
      %p220 = por %p218, %p219
      %p221 = scmp.ne.s32.totalorder %s207, %s208
      %p222 = scmp.eq.s32.totalorder %s27, 1
      %p223 = por %p221, %p222
      %p225 = scmp.ne.s32.totalorder %s208, %s224
      %p226 = scmp.eq.s32.totalorder %s27, 0
      %p227 = por %p225, %p226
      %p228 = scmp.le.s32.totalorder 1, %s21
      %p229 = scmp.lt.s32.totalorder %s21, 3
      %p230 = pnand %p228, %p229
      %p231 = pneg %p230
      // Predicated region
      $region9: #{tpu_custom_call.1} parent=5 // pred_check
        _
      $region10: #{tpu_custom_call.1} parent=5 // pred_check_branch
        %233 = sbr.rel (%p230) target = $region12
      $region11: #{tpu_custom_call.1} parent=5 // pred_region
        %s234 = ssub.s32 %s21, 1
        // Predicated region
        $region13: #{tpu_custom_call.1} parent=11 // pred_check
          %p235 = pneg %p68
        $region14: #{tpu_custom_call.1} parent=11 // pred_check_branch
          %237 = sbr.rel (%p235) target = $region16
        $region15: #{tpu_custom_call.1} parent=11 // pred_region
          _
        $region16: #{tpu_custom_call.1} parent=11 // pred_fallthru
          _
        // Predicated region
        $region17: #{tpu_custom_call.1} parent=11 // pred_check
          %p238 = pneg %p89
        $region18: #{tpu_custom_call.1} parent=11 // pred_check_branch
          %240 = sbr.rel (%p238) target = $region20
        $region19: #{tpu_custom_call.1} parent=11 // pred_region
          _
        $region20: #{tpu_custom_call.1} parent=11 // pred_fallthru
          _
        // Predicated region
        $region21: #{tpu_custom_call.1} parent=11 // pred_check
          %p241 = pneg %p110
        $region22: #{tpu_custom_call.1} parent=11 // pred_check_branch
          %243 = sbr.rel (%p241) target = $region24
        $region23: #{tpu_custom_call.1} parent=11 // pred_region
          _
        $region24: #{tpu_custom_call.1} parent=11 // pred_fallthru
          _
        // Predicated region
        $region25: #{tpu_custom_call.1} parent=11 // pred_check
          %p244 = pneg %p131
        $region26: #{tpu_custom_call.1} parent=11 // pred_check_branch
          %246 = sbr.rel (%p244) target = $region28
        $region27: #{tpu_custom_call.1} parent=11 // pred_region
          _
        $region28: #{tpu_custom_call.1} parent=11 // pred_fallthru
          _
        // Predicated region
        $region29: #{tpu_custom_call.1} parent=11 // pred_check
          %p247 = pneg %p152
        $region30: #{tpu_custom_call.1} parent=11 // pred_check_branch
          %249 = sbr.rel (%p247) target = $region32
        $region31: #{tpu_custom_call.1} parent=11 // pred_region
          %s251 = ssub.s32 512, 512
          %252 = vsyncadd [#allocation6], %s251
          %s253 = sshll.u32 [#allocation5], 4
          %s254 = int_to_ptr.vmem [resolvable:$true] %s253
          %259 = dma.hbm_to_vmem [thread:$0]  %s5, 512, %s254, [#allocation6], 256, 256, 16
        $region32: #{tpu_custom_call.1} parent=11 // pred_fallthru
          _
        // Predicated region
        $region33: #{tpu_custom_call.1} parent=11 // pred_check
          %p260 = pneg %p173
        $region34: #{tpu_custom_call.1} parent=11 // pred_check_branch
          %262 = sbr.rel (%p260) target = $region36
        $region35: #{tpu_custom_call.1} parent=11 // pred_region
          _
        $region36: #{tpu_custom_call.1} parent=11 // pred_fallthru
          _
        // Predicated region
        $region37: #{tpu_custom_call.1} parent=11 // pred_check
          %p263 = pneg %p194
        $region38: #{tpu_custom_call.1} parent=11 // pred_check_branch
          %265 = sbr.rel (%p263) target = $region40
        $region39: #{tpu_custom_call.1} parent=11 // pred_region
          _
        $region40: #{tpu_custom_call.1} parent=11 // pred_fallthru
          _
      $region12: #{tpu_custom_call.1} parent=5 // pred_fallthru
        _
      %p266 = scmp.lt.s32.totalorder %s21, 2
      // Predicated region
      $region41: #{tpu_custom_call.1} parent=5 // pred_check
        %p267 = pneg %p266
      $region42: #{tpu_custom_call.1} parent=5 // pred_check_branch
        %269 = sbr.rel (%p267) target = $region44
      $region43: #{tpu_custom_call.1} parent=5 // pred_region
        // Predicated region
        $region45: #{tpu_custom_call.1} parent=43 // pred_check
          %p270 = pneg %p41
        $region46: #{tpu_custom_call.1} parent=43 // pred_check_branch
          %272 = sbr.rel (%p270) target = $region48
        $region47: #{tpu_custom_call.1} parent=43 // pred_region
          %s273 = sand.u32 %s31, 1
          %s274 = scalar_lea.sflag [#allocation3], %s273
          %s275 = sand.u32 %s31, 1
          %s276 = smul.addr %s275, 8
          %s277 = scalar_lea.vmem [#allocation2], %s276
          %s279 = ssub.s32 128, 128
          %280 = vsyncadd %s274, %s279
          %s281 = smul.addr %s21, 2
          %s282 = smul.addr %s281, 64
          %s283 = scalar_lea.hbm %s0, %s282
          %s285 = sshll.u32 %s277, 4
          %s286 = int_to_ptr.vmem [resolvable:$true] %s285
          %288 = dma.hbm_to_vmem [thread:$0]  %s283, 128, %s286, %s274
        $region48: #{tpu_custom_call.1} parent=43 // pred_fallthru
          _
      $region44: #{tpu_custom_call.1} parent=5 // pred_fallthru
        _
      %p289 = scmp.le.s32.totalorder 1, %s21
      %p290 = scmp.lt.s32.totalorder %s21, 3
      %p291 = pnand %p289, %p290
      %p292 = pneg %p291
      // Predicated region
      $region49: #{tpu_custom_call.1} parent=5 // pred_check
        _
      $region50: #{tpu_custom_call.1} parent=5 // pred_check_branch
        %294 = sbr.rel (%p291) target = $region52
      $region51: #{tpu_custom_call.1} parent=5 // pred_region
        %s295 = ssub.s32 %s21, 1
        %s296 = sand.u32 %s34, 1
        %s297 = scalar_lea.sflag [#allocation3], %s296
        %s298 = sand.u32 %s34, 1
        %s299 = smul.addr %s298, 8
        %s300 = scalar_lea.vmem [#allocation2], %s299
        // Predicated region
        $region53: #{tpu_custom_call.1} parent=51 // pred_check
          %p301 = pneg %p47
        $region54: #{tpu_custom_call.1} parent=51 // pred_check_branch
          %303 = sbr.rel (%p301) target = $region56
        $region55: #{tpu_custom_call.1} parent=51 // pred_region
          %304 = dma.done %s297, 128
        $region56: #{tpu_custom_call.1} parent=51 // pred_fallthru
          _
        // Predicated region
        $region57: #{tpu_custom_call.1} parent=51 // pred_check
          %p305 = pneg %p152
        $region58: #{tpu_custom_call.1} parent=51 // pred_check_branch
          %307 = sbr.rel (%p305) target = $region60
        $region59: #{tpu_custom_call.1} parent=51 // pred_region
          %308 = dma.done [#allocation6], 512
        $region60: #{tpu_custom_call.1} parent=51 // pred_fallthru
          _
        %s309 = sand.u32 %s34, 1
        %s310 = scalar_lea.sflag [#allocation3], %s309
        %s311 = sand.u32 %s34, 1
        %s312 = smul.addr %s311, 8
        %s313 = scalar_lea.vmem [#allocation2], %s312
        %p314 = pneg %p47
        %p315 = pneg %p44
        %p316 = pneg %p68
        %p317 = pneg %p65
        %p318 = pneg %p89
        %p319 = pneg %p86
        %p320 = pneg %p110
        %p321 = pneg %p107
        %p322 = pneg %p131
        %p323 = pneg %p128
        %p324 = pneg %p152
        %p325 = pneg %p149
        %p326 = pneg %p173
        %p327 = pneg %p170
        %p328 = pneg %p194
        %p329 = pneg %p191
        %p330 = pneg %p220
        %p331 = pneg %p217
        %s332 = sand.u32 %s207, 1
        %s333 = scalar_lea.sflag [#allocation4], %s332
        %s334 = sand.u32 %s207, 1
        %s335 = smul.addr %s334, 8
        %s336 = scalar_lea.vmem [#allocation7], %s335
        %v337 = vld [vmem:[%s300] sm:$0xff]
        %v338 = vld [vmem:[%s1] sm:$0x3]
        %v339 = vld [vmem:[%s4] sm:$0x3]
        %v340 = vld [vmem:[#allocation5] sm:$0xff]
        %v341 = vld [vmem:[#allocation5 + $0x8] sm:$0xff]
        %v342 = vld [vmem:[#allocation5 + $0x10] sm:$0x1]
        %v343 = vld [vmem:[#allocation5 + $0x18] sm:$0x1]
        %v344 = vld [vmem:[%s2] sm:$0x3]
        %v345 = vld [vmem:[%s3] sm:$0x3]
        %v346 = vld [vmem:[%s6] sm:$0x3]
        %v347 = vld [vmem:[%s7] sm:$0x3]
        %349 = vset.pattern.permute.xlu0 0
        %350 = vperm.xlu0 %349, %v338
        %v351 = vpop.permute.xlu0 %350
        %v354 = vlaneseq
        %v355 = vshrl.u32 %v354, 7
        %v356 = vsub.s32 0, %v355
        %v357 = vrot.slane %v337, %v356
        %v358 = vlaneseq
        %v359 = vshrl.u32 %v358, 7
        %v360 = vsub.s32 4, %v359
        %v361 = vrot.slane %v337, %v360
        %v364 = vlaneseq
        %v365 = vshrl.u32 %v364, 7
        %v366 = vsub.s32 0, %v365
        %v367 = vrot.slane %v357, %v366
        %v368 = vlaneseq
        %v369 = vshrl.u32 %v368, 7
        %v370 = vsub.s32 0, %v369
        %v371 = vrot.slane %v361, %v370
        %v372 = vmul.f32 %v351, %v367
        %v373 = vmul.f32 %v351, %v371
        %v374 = vadd.f32 %v372, 0.0
        %v375 = vadd.f32 %v373, 0.0
        %376 = vset.pattern.permute.xlu0 1
        %377 = vperm.xlu0 %376, %v338
        %v378 = vpop.permute.xlu0 %377
        %v380 = vlaneseq
        %v381 = vshrl.u32 %v380, 7
        %v382 = vsub.s32 1, %v381
        %v383 = vrot.slane %v337, %v382
        %v384 = vlaneseq
        %v385 = vshrl.u32 %v384, 7
        %v386 = vsub.s32 5, %v385
        %v387 = vrot.slane %v337, %v386
        %v390 = vlaneseq
        %v391 = vshrl.u32 %v390, 7
        %v392 = vsub.s32 1, %v391
        %v393 = vrot.slane %v383, %v392
        %v394 = vlaneseq
        %v395 = vshrl.u32 %v394, 7
        %v396 = vsub.s32 1, %v395
        %v397 = vrot.slane %v387, %v396
        %v398 = vmul.f32 %v378, %v393
        %v399 = vmul.f32 %v378, %v397
        %v400 = vadd.f32 %v374, %v398
        %v401 = vadd.f32 %v375, %v399
        %402 = vset.pattern.permute.xlu0 2
        %403 = vperm.xlu0 %402, %v338
        %v404 = vpop.permute.xlu0 %403
        %v406 = vlaneseq
        %v407 = vshrl.u32 %v406, 7
        %v408 = vsub.s32 2, %v407
        %v409 = vrot.slane %v337, %v408
        %v410 = vlaneseq
        %v411 = vshrl.u32 %v410, 7
        %v412 = vsub.s32 6, %v411
        %v413 = vrot.slane %v337, %v412
        %v416 = vlaneseq
        %v417 = vshrl.u32 %v416, 7
        %v418 = vsub.s32 2, %v417
        %v419 = vrot.slane %v409, %v418
        %v420 = vlaneseq
        %v421 = vshrl.u32 %v420, 7
        %v422 = vsub.s32 2, %v421
        %v423 = vrot.slane %v413, %v422
        %v424 = vmul.f32 %v404, %v419
        %v425 = vmul.f32 %v404, %v423
        %v426 = vadd.f32 %v400, %v424
        %v427 = vadd.f32 %v401, %v425
        %428 = vset.pattern.permute.xlu0 3
        %429 = vperm.xlu0 %428, %v338
        %v430 = vpop.permute.xlu0 %429
        %v432 = vlaneseq
        %v433 = vshrl.u32 %v432, 7
        %v434 = vsub.s32 3, %v433
        %v435 = vrot.slane %v337, %v434
        %v436 = vlaneseq
        %v437 = vshrl.u32 %v436, 7
        %v438 = vsub.s32 7, %v437
        %v439 = vrot.slane %v337, %v438
        %v442 = vlaneseq
        %v443 = vshrl.u32 %v442, 7
        %v444 = vsub.s32 3, %v443
        %v445 = vrot.slane %v435, %v444
        %v446 = vlaneseq
        %v447 = vshrl.u32 %v446, 7
        %v448 = vsub.s32 3, %v447
        %v449 = vrot.slane %v439, %v448
        %v450 = vmul.f32 %v430, %v445
        %v451 = vmul.f32 %v430, %v449
        %v452 = vadd.f32 %v426, %v450
        %v453 = vadd.f32 %v427, %v451
        %455 = vset.pattern.permute.xlu0 0
        %456 = vperm.xlu0 %455, %v344
        %v457 = vpop.permute.xlu0 %456
        %v459 = vmul.f32 %v452, %v457
        %v460 = vmul.f32 %v453, %v457
        %462 = vset.pattern.permute.xlu0 0
        %463 = vperm.xlu0 %462, %v345
        %v464 = vpop.permute.xlu0 %463
        %v466 = vadd.f32 %v459, %v464
        %v467 = vadd.f32 %v460, %v464
        %v470 = vcombine.low %v466, %v467
        %472 = vst [vmem:[%s336] sm:$0x33] %v470
        %473 = vrot.lane.b32.xlu0 %v466, 17
        %v474 = vpop.permute.xlu0 %473
        %475 = vrot.lane.b32.xlu0 %v467, 17
        %v476 = vpop.permute.xlu0 %475
        %v477 = vlaneseq
        %v478 = vand.u32 %v477, 127
        %vm479 = vcmp.lt.s32.totalorder %v478, 17
        %v480 = vsel %vm479, %v474, %v476
        %v481 = vsel %vm479, %v476, %v474
        %v482 = vlaneseq
        %v483 = vshrl.u32 %v482, 7
        %v484 = vsub.s32 0, %v483
        %v485 = vrot.slane %v340, %v484
        %v486 = vlaneseq
        %v487 = vshrl.u32 %v486, 7
        %v488 = vsub.s32 0, %v487
        %v489 = vrot.slane %v341, %v488
        %v490 = vmul.f32 %v481, %v485
        %v491 = vmul.f32 %v480, %v489
        %493 = vset.pattern.permute.xlu0 0
        %494 = vperm.xlu0 %493, %v339
        %v495 = vpop.permute.xlu0 %494
        %v497 = vmul.f32 %v495, %v490
        %v498 = vmul.f32 %v495, %v491
        %v499 = vadd.f32 %v497, 0.0
        %v500 = vadd.f32 %v498, 0.0
        %501 = vrot.lane.b32.xlu0 %v466, 16
        %v502 = vpop.permute.xlu0 %501
        %503 = vrot.lane.b32.xlu0 %v467, 16
        %v504 = vpop.permute.xlu0 %503
        %vm505 = vcmp.lt.s32.totalorder %v478, 16
        %v506 = vsel %vm505, %v502, %v504
        %v507 = vsel %vm505, %v504, %v502
        %v508 = vlaneseq
        %v509 = vshrl.u32 %v508, 7
        %v510 = vsub.s32 1, %v509
        %v511 = vrot.slane %v340, %v510
        %v512 = vlaneseq
        %v513 = vshrl.u32 %v512, 7
        %v514 = vsub.s32 1, %v513
        %v515 = vrot.slane %v341, %v514
        %v516 = vmul.f32 %v507, %v511
        %v517 = vmul.f32 %v506, %v515
        %518 = vset.pattern.permute.xlu0 1
        %519 = vperm.xlu0 %518, %v339
        %v520 = vpop.permute.xlu0 %519
        %v522 = vmul.f32 %v520, %v516
        %v523 = vmul.f32 %v520, %v517
        %v524 = vadd.f32 %v499, %v522
        %v525 = vadd.f32 %v500, %v523
        %526 = vrot.lane.b32.xlu0 %v466, 15
        %v527 = vpop.permute.xlu0 %526
        %528 = vrot.lane.b32.xlu0 %v467, 15
        %v529 = vpop.permute.xlu0 %528
        %vm530 = vcmp.lt.s32.totalorder %v478, 15
        %v531 = vsel %vm530, %v527, %v529
        %v532 = vsel %vm530, %v529, %v527
        %v533 = vlaneseq
        %v534 = vshrl.u32 %v533, 7
        %v535 = vsub.s32 2, %v534
        %v536 = vrot.slane %v340, %v535
        %v537 = vlaneseq
        %v538 = vshrl.u32 %v537, 7
        %v539 = vsub.s32 2, %v538
        %v540 = vrot.slane %v341, %v539
        %v541 = vmul.f32 %v532, %v536
        %v542 = vmul.f32 %v531, %v540
        %543 = vset.pattern.permute.xlu0 2
        %544 = vperm.xlu0 %543, %v339
        %v545 = vpop.permute.xlu0 %544
        %v547 = vmul.f32 %v545, %v541
        %v548 = vmul.f32 %v545, %v542
        %v549 = vadd.f32 %v524, %v547
        %v550 = vadd.f32 %v525, %v548
        %551 = vrot.lane.b32.xlu0 %v466, 1
        %v552 = vpop.permute.xlu0 %551
        %553 = vrot.lane.b32.xlu0 %v467, 1
        %v554 = vpop.permute.xlu0 %553
        %vm555 = vcmp.lt.s32.totalorder %v478, 1
        %v556 = vsel %vm555, %v552, %v554
        %v557 = vsel %vm555, %v554, %v552
        %v558 = vlaneseq
        %v559 = vshrl.u32 %v558, 7
        %v560 = vsub.s32 3, %v559
        %v561 = vrot.slane %v340, %v560
        %v562 = vlaneseq
        %v563 = vshrl.u32 %v562, 7
        %v564 = vsub.s32 3, %v563
        %v565 = vrot.slane %v341, %v564
        %v566 = vmul.f32 %v557, %v561
        %v567 = vmul.f32 %v556, %v565
        %568 = vset.pattern.permute.xlu0 3
        %569 = vperm.xlu0 %568, %v339
        %v570 = vpop.permute.xlu0 %569
        %v572 = vmul.f32 %v570, %v566
        %v573 = vmul.f32 %v570, %v567
        %v574 = vadd.f32 %v549, %v572
        %v575 = vadd.f32 %v550, %v573
        %v576 = vlaneseq
        %v577 = vshrl.u32 %v576, 7
        %v578 = vsub.s32 4, %v577
        %v579 = vrot.slane %v340, %v578
        %v580 = vlaneseq
        %v581 = vshrl.u32 %v580, 7
        %v582 = vsub.s32 4, %v581
        %v583 = vrot.slane %v341, %v582
        %v584 = vmul.f32 %v466, %v579
        %v585 = vmul.f32 %v467, %v583
        %586 = vset.pattern.permute.xlu0 4
        %587 = vperm.xlu0 %586, %v339
        %v588 = vpop.permute.xlu0 %587
        %v590 = vmul.f32 %v588, %v584
        %v591 = vmul.f32 %v588, %v585
        %v592 = vadd.f32 %v574, %v590
        %v593 = vadd.f32 %v575, %v591
        %594 = vrot.lane.b32.xlu0 %v466, 127
        %v595 = vpop.permute.xlu0 %594
        %596 = vrot.lane.b32.xlu0 %v467, 127
        %v597 = vpop.permute.xlu0 %596
        %vm598 = vcmp.lt.s32.totalorder %v478, 127
        %v599 = vsel %vm598, %v595, %v597
        %v600 = vsel %vm598, %v597, %v595
        %v601 = vlaneseq
        %v602 = vshrl.u32 %v601, 7
        %v603 = vsub.s32 5, %v602
        %v604 = vrot.slane %v340, %v603
        %v605 = vlaneseq
        %v606 = vshrl.u32 %v605, 7
        %v607 = vsub.s32 5, %v606
        %v608 = vrot.slane %v341, %v607
        %v609 = vmul.f32 %v599, %v604
        %v610 = vmul.f32 %v600, %v608
        %611 = vset.pattern.permute.xlu0 5
        %612 = vperm.xlu0 %611, %v339
        %v613 = vpop.permute.xlu0 %612
        %v615 = vmul.f32 %v613, %v609
        %v616 = vmul.f32 %v613, %v610
        %v617 = vadd.f32 %v592, %v615
        %v618 = vadd.f32 %v593, %v616
        %619 = vrot.lane.b32.xlu0 %v466, 113
        %v620 = vpop.permute.xlu0 %619
        %621 = vrot.lane.b32.xlu0 %v467, 113
        %v622 = vpop.permute.xlu0 %621
        %vm623 = vcmp.lt.s32.totalorder %v478, 113
        %v624 = vsel %vm623, %v620, %v622
        %v625 = vsel %vm623, %v622, %v620
        %v626 = vlaneseq
        %v627 = vshrl.u32 %v626, 7
        %v628 = vsub.s32 6, %v627
        %v629 = vrot.slane %v340, %v628
        %v630 = vlaneseq
        %v631 = vshrl.u32 %v630, 7
        %v632 = vsub.s32 6, %v631
        %v633 = vrot.slane %v341, %v632
        %v634 = vmul.f32 %v624, %v629
        %v635 = vmul.f32 %v625, %v633
        %636 = vset.pattern.permute.xlu0 6
        %637 = vperm.xlu0 %636, %v339
        %v638 = vpop.permute.xlu0 %637
        %v640 = vmul.f32 %v638, %v634
        %v641 = vmul.f32 %v638, %v635
        %v642 = vadd.f32 %v617, %v640
        %v643 = vadd.f32 %v618, %v641
        %644 = vrot.lane.b32.xlu0 %v466, 112
        %v645 = vpop.permute.xlu0 %644
        %646 = vrot.lane.b32.xlu0 %v467, 112
        %v647 = vpop.permute.xlu0 %646
        %vm648 = vcmp.lt.s32.totalorder %v478, 112
        %v649 = vsel %vm648, %v645, %v647
        %v650 = vsel %vm648, %v647, %v645
        %v651 = vlaneseq
        %v652 = vshrl.u32 %v651, 7
        %v653 = vsub.s32 7, %v652
        %v654 = vrot.slane %v340, %v653
        %v655 = vlaneseq
        %v656 = vshrl.u32 %v655, 7
        %v657 = vsub.s32 7, %v656
        %v658 = vrot.slane %v341, %v657
        %v659 = vmul.f32 %v649, %v654
        %v660 = vmul.f32 %v650, %v658
        %661 = vset.pattern.permute.xlu0 7
        %662 = vperm.xlu0 %661, %v339
        %v663 = vpop.permute.xlu0 %662
        %v665 = vmul.f32 %v663, %v659
        %v666 = vmul.f32 %v663, %v660
        %v667 = vadd.f32 %v642, %v665
        %v668 = vadd.f32 %v643, %v666
        %669 = vrot.lane.b32.xlu0 %v466, 111
        %v670 = vpop.permute.xlu0 %669
        %671 = vrot.lane.b32.xlu0 %v467, 111
        %v672 = vpop.permute.xlu0 %671
        %vm673 = vcmp.lt.s32.totalorder %v478, 111
        %v674 = vsel %vm673, %v670, %v672
        %v675 = vsel %vm673, %v672, %v670
        %v676 = vlaneseq
        %v677 = vshrl.u32 %v676, 7
        %v678 = vsub.s32 0, %v677
        %v679 = vrot.slane %v342, %v678
        %v680 = vlaneseq
        %v681 = vshrl.u32 %v680, 7
        %v682 = vsub.s32 0, %v681
        %v683 = vrot.slane %v343, %v682
        %v684 = vmul.f32 %v674, %v679
        %v685 = vmul.f32 %v675, %v683
        %686 = vset.pattern.permute.xlu0 8
        %687 = vperm.xlu0 %686, %v339
        %v688 = vpop.permute.xlu0 %687
        %v690 = vmul.f32 %v688, %v684
        %v691 = vmul.f32 %v688, %v685
        %v692 = vadd.f32 %v667, %v690
        %v693 = vadd.f32 %v668, %v691
        %695 = vset.pattern.permute.xlu0 0
        %696 = vperm.xlu0 %695, %v346
        %v697 = vpop.permute.xlu0 %696
        %v699 = vmul.f32 %v692, %v697
        %v700 = vmul.f32 %v693, %v697
        %702 = vset.pattern.permute.xlu0 0
        %703 = vperm.xlu0 %702, %v347
        %v704 = vpop.permute.xlu0 %703
        %v706 = vadd.f32 %v699, %v704
        %v707 = vadd.f32 %v700, %v704
        %v710 = vcombine.low %v706, %v707
        %v711 = vrot.slane %v710, 6
        %713 = vst [vmem:[%s336] sm:$0xcc] %v711
        %s714 = sand.u32 %s207, 1
        %s715 = scalar_lea.sflag [#allocation4], %s714
        %s716 = sand.u32 %s207, 1
        %s717 = smul.addr %s716, 8
        %s718 = scalar_lea.vmem [#allocation7], %s717
        // Predicated region
        $region61: #{tpu_custom_call.1} parent=51 // pred_check
          %p719 = pneg %p217
        $region62: #{tpu_custom_call.1} parent=51 // pred_check_branch
          %721 = sbr.rel (%p719) target = $region64
        $region63: #{tpu_custom_call.1} parent=51 // pred_region
          %s723 = ssub.s32 128, 128
          %724 = vsyncadd %s715, %s723
          %s725 = smul.addr %s26, 2
          %s726 = smul.addr %s725, 64
          %s727 = scalar_lea.hbm %s8, %s726
          %s729 = sshll.u32 %s718, 4
          %s730 = int_to_ptr.vmem [resolvable:$true] %s729
          %732 = dma.vmem_to_hbm [thread:$0]  %s730, 128, %s727, %s715
        $region64: #{tpu_custom_call.1} parent=51 // pred_fallthru
          _
      $region52: #{tpu_custom_call.1} parent=5 // pred_fallthru
        _
      %p733 = scmp.le.s32.totalorder 2, %s21
      // Predicated region
      $region65: #{tpu_custom_call.1} parent=5 // pred_check
        %p734 = pneg %p733
      $region66: #{tpu_custom_call.1} parent=5 // pred_check_branch
        %736 = sbr.rel (%p734) target = $region68
      $region67: #{tpu_custom_call.1} parent=5 // pred_region
        %s737 = ssub.s32 %s21, 2
        // Predicated region
        $region69: #{tpu_custom_call.1} parent=67 // pred_check
          %p738 = pneg %p223
        $region70: #{tpu_custom_call.1} parent=67 // pred_check_branch
          %740 = sbr.rel (%p738) target = $region72
        $region71: #{tpu_custom_call.1} parent=67 // pred_region
          %s741 = sand.u32 %s208, 1
          %s742 = scalar_lea.sflag [#allocation4], %s741
          %s743 = sand.u32 %s208, 1
          %s744 = smul.addr %s743, 8
          %s745 = scalar_lea.vmem [#allocation7], %s744
          %746 = dma.done %s742, 128
        $region72: #{tpu_custom_call.1} parent=67 // pred_fallthru
          _
      $region68: #{tpu_custom_call.1} parent=5 // pred_fallthru
        _
    $region6: #{tpu_custom_call.1} parent=1 // loop_footer
      %s25 = sadd.s32 1, %s21
    $region7: #{tpu_custom_call.1} parent=1 // loop_footer_branch
      %20 = sbr.rel target = $region3
    $region8: #{tpu_custom_call.1} parent=1 // loop_exit
      _
    %747 = vsyncpa [#allocation3], 1
    %s748 = scalar_lea.sflag [#allocation3], 1
    %749 = vsyncpa %s748, 1
    %750 = vsyncpa [#allocation6], 1
    %751 = vsyncpa [#allocation4], 1
    %s752 = scalar_lea.sflag [#allocation4], 1
    %753 = vsyncpa %s752, 1

</llo_original>
